<compile_context>
chip_gen: v7x
topology: tpu7x:2x2x1
jax: 0.10.0
libtpu: 0.0.40
codegen_flags: <defaults>
</compile_context>

<pallas_src>
import numpy as np
import jax
import jax.numpy as jnp
from jax.experimental import pallas as pl
from jax.experimental.pallas import tpu as pltpu

NUM_LATENT_CLASSES = 4           # module asserts == 4
ONLINE_ROW = NUM_LATENT_CLASSES  # row index of online mu / log_sigma
N_ROWS = NUM_LATENT_CLASSES + 1  # 5 table rows


def _cdiv(a, b):
    return -(-a // b)


def _latent_kernel(idx_ref, noise_ref, mu_tab_ref, ls_tab_ref, sig_tab_ref,
                   mu_out, ls_out, samp_out):
    """One (block_rows, W) lane-packed tile.

    idx_ref   : (block_rows, W) int32 per-lane class ids (-1 already -> 4)
    noise_ref : (block_rows, W) f32 standard-normal noise
    *_tab_ref : (5, W) lane-packed parameter tables (resident across the grid)
    """
    idx = idx_ref[...]
    mu = jnp.zeros(mu_out.shape, jnp.float32)
    ls = jnp.zeros(mu_out.shape, jnp.float32)
    sig = jnp.zeros(mu_out.shape, jnp.float32)

    # 5-way VPU select-chain gather over the resident tables.  The (1, W)
    # table rows broadcast inside jnp.where (no materialized full-tile
    # broadcasts).  Out-of-range ids fall through to zeros.
    for k in range(N_ROWS):
        sel = idx == k
        mu = jnp.where(sel, mu_tab_ref[k:k + 1, :], mu)
        ls = jnp.where(sel, ls_tab_ref[k:k + 1, :], ls)
        sig = jnp.where(sel, sig_tab_ref[k:k + 1, :], sig)

    mu_out[...] = mu
    ls_out[...] = ls
    # Reparameterized sample; sigma was gathered (no per-element exp on EUP).
    samp_out[...] = mu + noise_ref[...] * sig


def gaussian_latent_forward(latent_ids, mu_table, log_sigma_table, key,
                            block_rows=None):
    """latent_ids: (B,) int in {-1,0,1,2,3}; tables: (5, D) f32; key: PRNGKey."""
    b = int(latent_ids.shape[0])
    n_rows, d = mu_table.shape
    assert n_rows == N_ROWS

    # ---- lane-dense packing: fold G batch rows into one 128-lane row ----
    if d < 128 and 128 % d == 0:
        g = 128 // d
    else:
        g = 1
    w = g * d

    # Remap -1 -> online row (4); everything as int32.
    idx = jnp.where(latent_ids == -1, ONLINE_ROW, latent_ids).astype(jnp.int32)

    # ---- grid sizing ----
    r = _cdiv(b, g)                    # packed rows holding real data
    r8 = _cdiv(r, 8) * 8               # sublane-aligned row count
    if block_rows is None:
        # ~1 MiB f32 per output block (HBM-roofline plateau); 5 double-buffered
        # streams * ~1 MiB ~= 10 MiB VMEM, under every gen's default budget.
        target = max(8, min(r8, ((1 << 20) // (4 * w)) // 8 * 8))
    else:
        target = max(8, (int(block_rows) // 8) * 8)
    num_tiles = _cdiv(r8, target)
    if r8 >= 64:
        num_tiles = max(num_tiles, 2)  # keep both v7x TensorCores busy
    block_rows = _cdiv(_cdiv(r8, num_tiles), 8) * 8   # spread padding
    r_pad = num_tiles * block_rows
    b_pad = r_pad * g

    # ---- build lane-packed operands (cheap XLA-side reshapes/pads) ----
    idx_pad = jnp.zeros((b_pad,), jnp.int32).at[:b].set(idx)
    idx_lane = jnp.repeat(idx_pad, d).reshape(r_pad, w)

    noise = jax.random.normal(key, (b, d), dtype=jnp.float32)
    noise_lane = jnp.zeros((b_pad, d), jnp.float32).at[:b].set(noise)
    noise_lane = noise_lane.reshape(r_pad, w)

    mu_tab = jnp.tile(mu_table.astype(jnp.float32), (1, g))          # (5, W)
    ls_tab = jnp.tile(log_sigma_table.astype(jnp.float32), (1, g))   # (5, W)
    sig_tab = jnp.exp(ls_tab)                                        # (5, W)

    row_block = lambda i: (i, 0)
    tab_block = lambda i: (0, 0)
    out_spec = pl.BlockSpec((block_rows, w), row_block)

    bytes_accessed = (5 * r_pad * w + 3 * n_rows * w) * 4
    mu_p, ls_p, samp_p = pl.pallas_call(
        _latent_kernel,
        out_shape=(
            jax.ShapeDtypeStruct((r_pad, w), jnp.float32),
            jax.ShapeDtypeStruct((r_pad, w), jnp.float32),
            jax.ShapeDtypeStruct((r_pad, w), jnp.float32),
        ),
        grid_spec=pltpu.PrefetchScalarGridSpec(
            num_scalar_prefetch=0,
            grid=(num_tiles,),
            in_specs=[
                pl.BlockSpec((block_rows, w), row_block),   # per-lane class ids
                pl.BlockSpec((block_rows, w), row_block),   # noise
                pl.BlockSpec((n_rows, w), tab_block),       # mu table (resident)
                pl.BlockSpec((n_rows, w), tab_block),       # log_sigma table
                pl.BlockSpec((n_rows, w), tab_block),       # sigma table
            ],
            out_specs=(out_spec, out_spec, out_spec),
        ),
        compiler_params=pltpu.CompilerParams(
            dimension_semantics=("parallel",)),
        cost_estimate=pl.CostEstimate(
            flops=int(22 * r_pad * w),
            transcendentals=0,
            bytes_accessed=int(bytes_accessed)),
    )(idx_lane, noise_lane, mu_tab, ls_tab, sig_tab)

    # Unpack the lane-dense slabs back to (B, D) logical layout (row-major
    # reshape, so this is metadata-only) and drop padded rows.
    mu = mu_p.reshape(b_pad, d)[:b]
    log_sigma = ls_p.reshape(b_pad, d)[:b]
    sample = samp_p.reshape(b_pad, d)[:b]
    return {"mu": mu, "log_sigma": log_sigma, "sample": sample}


if __name__ == "__main__":
    key = jax.random.PRNGKey(0)
    k_mu, k_ls, k_omu, k_ols, k_noise = jax.random.split(key, 5)

    B = 8
    LATENT_DIM = 32

    # Synthetic "trained" parameters with the module's shapes:
    # mu_k / log_sigma_k : (latent_dim,), online_mu / online_log_sigma : (latent_dim,)
    class_mu = jax.random.normal(k_mu, (NUM_LATENT_CLASSES, LATENT_DIM), jnp.float32) * 0.5
    class_log_sigma = jax.random.normal(k_ls, (NUM_LATENT_CLASSES, LATENT_DIM), jnp.float32) * 0.1
    online_mu = jax.random.normal(k_omu, (LATENT_DIM,), jnp.float32) * 0.5
    online_log_sigma = jax.random.normal(k_ols, (LATENT_DIM,), jnp.float32) * 0.1

    # Parameter tables: rows 0..3 = class params, row 4 = online params.
    mu_table = jnp.concatenate([class_mu, online_mu[None, :]], axis=0)               # (5, D)
    log_sigma_table = jnp.concatenate(
        [class_log_sigma, online_log_sigma[None, :]], axis=0)                        # (5, D)

    # inputs['latent']: batch of class ids, -1 selects the online latent.
    latent_ids = jnp.array([-1, 0, 1, 2, 3, -1, 2, 0], dtype=jnp.int32)

    out = gaussian_latent_forward(latent_ids, mu_table, log_sigma_table, key=k_noise)
    jax.block_until_ready(out)

    # Pure-JAX / numpy reference (noise is reproducible from the same key).
    ids_np = np.asarray(latent_ids)
    idx_ref = np.where(ids_np == -1, ONLINE_ROW, ids_np)
    mu_ref = np.asarray(mu_table)[idx_ref]
    ls_ref = np.asarray(log_sigma_table)[idx_ref]
    noise_ref = np.asarray(jax.random.normal(k_noise, (B, LATENT_DIM), dtype=jnp.float32))
    samp_ref = mu_ref + noise_ref * np.exp(ls_ref)

    np.testing.assert_allclose(np.asarray(out["mu"]), mu_ref, rtol=0, atol=0)
    np.testing.assert_allclose(np.asarray(out["log_sigma"]), ls_ref, rtol=0, atol=0)
    np.testing.assert_allclose(np.asarray(out["sample"]), samp_ref, rtol=1e-5, atol=1e-5)
    assert np.all(np.isfinite(np.asarray(out["sample"])))

    print("KERNEL_OK")
</pallas_src>

<mosaic_0001>
module attributes {stable_mosaic.version = 11 : i64} {
  func.func @_latent_kernel(%arg0: i32, %arg1: memref<8x128xi32, #tpu.memory_space<vmem>>, %arg2: memref<8x128xf32, #tpu.memory_space<vmem>>, %arg3: memref<5x128xf32, #tpu.memory_space<vmem>>, %arg4: memref<5x128xf32, #tpu.memory_space<vmem>>, %arg5: memref<5x128xf32, #tpu.memory_space<vmem>>, %arg6: memref<8x128xf32, #tpu.memory_space<vmem>>, %arg7: memref<8x128xf32, #tpu.memory_space<vmem>>, %arg8: memref<8x128xf32, #tpu.memory_space<vmem>>) attributes {dimension_semantics = [#tpu.dimension_semantics<parallel>], iteration_bounds = array<i64: 1>, scalar_prefetch = 0 : i64, scratch_operands = 0 : i64, tpu.core_type = #tpu.core_type<tc>, window_params = [{transform_indices = @transform_0, window_bounds = array<i64: 8, 128>}, {transform_indices = @transform_1, window_bounds = array<i64: 8, 128>}, {pipeline_mode = #tpu.pipeline_mode<synchronous>, transform_indices = @transform_2, window_bounds = array<i64: 5, 128>}, {pipeline_mode = #tpu.pipeline_mode<synchronous>, transform_indices = @transform_3, window_bounds = array<i64: 5, 128>}, {pipeline_mode = #tpu.pipeline_mode<synchronous>, transform_indices = @transform_4, window_bounds = array<i64: 5, 128>}, {transform_indices = @transform_5, window_bounds = array<i64: 8, 128>}, {transform_indices = @transform_6, window_bounds = array<i64: 8, 128>}, {transform_indices = @transform_7, window_bounds = array<i64: 8, 128>}]} {
    %c0 = arith.constant 0 : index
    %c0_0 = arith.constant 0 : index
    %0 = vector.load %arg1[%c0, %c0_0] : memref<8x128xi32, #tpu.memory_space<vmem>>, vector<8x128xi32>
    %cst = arith.constant 0.000000e+00 : f32
    %1 = vector.broadcast %cst : f32 to vector<8x128xf32>
    %cst_1 = arith.constant 0.000000e+00 : f32
    %2 = vector.broadcast %cst_1 : f32 to vector<8x128xf32>
    %cst_2 = arith.constant 0.000000e+00 : f32
    %3 = vector.broadcast %cst_2 : f32 to vector<8x128xf32>
    %c0_i32 = arith.constant 0 : i32
    %4 = vector.broadcast %c0_i32 : i32 to vector<8x128xi32>
    %5 = arith.cmpi eq, %0, %4 : vector<8x128xi32>
    %c0_3 = arith.constant 0 : index
    %c0_4 = arith.constant 0 : index
    %6 = vector.load %arg3[%c0_3, %c0_4] : memref<5x128xf32, #tpu.memory_space<vmem>>, vector<1x128xf32>
    %7 = vector.shape_cast %6 : vector<1x128xf32> to vector<1x128xf32>
    %8 = vector.broadcast %7 : vector<1x128xf32> to vector<8x128xf32>
    %9 = arith.select %5, %8, %1 : vector<8x128xi1>, vector<8x128xf32>
    %c0_5 = arith.constant 0 : index
    %c0_6 = arith.constant 0 : index
    %10 = vector.load %arg4[%c0_5, %c0_6] : memref<5x128xf32, #tpu.memory_space<vmem>>, vector<1x128xf32>
    %11 = vector.shape_cast %10 : vector<1x128xf32> to vector<1x128xf32>
    %12 = vector.broadcast %11 : vector<1x128xf32> to vector<8x128xf32>
    %13 = arith.select %5, %12, %2 : vector<8x128xi1>, vector<8x128xf32>
    %c0_7 = arith.constant 0 : index
    %c0_8 = arith.constant 0 : index
    %14 = vector.load %arg5[%c0_7, %c0_8] : memref<5x128xf32, #tpu.memory_space<vmem>>, vector<1x128xf32>
    %15 = vector.shape_cast %14 : vector<1x128xf32> to vector<1x128xf32>
    %16 = vector.broadcast %15 : vector<1x128xf32> to vector<8x128xf32>
    %17 = arith.select %5, %16, %3 : vector<8x128xi1>, vector<8x128xf32>
    %c1_i32 = arith.constant 1 : i32
    %18 = vector.broadcast %c1_i32 : i32 to vector<8x128xi32>
    %19 = arith.cmpi eq, %0, %18 : vector<8x128xi32>
    %c1 = arith.constant 1 : index
    %c0_9 = arith.constant 0 : index
    %20 = vector.load %arg3[%c1, %c0_9] : memref<5x128xf32, #tpu.memory_space<vmem>>, vector<1x128xf32>
    %21 = vector.shape_cast %20 : vector<1x128xf32> to vector<1x128xf32>
    %22 = vector.broadcast %21 : vector<1x128xf32> to vector<8x128xf32>
    %23 = arith.select %19, %22, %9 : vector<8x128xi1>, vector<8x128xf32>
    %c1_10 = arith.constant 1 : index
    %c0_11 = arith.constant 0 : index
    %24 = vector.load %arg4[%c1_10, %c0_11] : memref<5x128xf32, #tpu.memory_space<vmem>>, vector<1x128xf32>
    %25 = vector.shape_cast %24 : vector<1x128xf32> to vector<1x128xf32>
    %26 = vector.broadcast %25 : vector<1x128xf32> to vector<8x128xf32>
    %27 = arith.select %19, %26, %13 : vector<8x128xi1>, vector<8x128xf32>
    %c1_12 = arith.constant 1 : index
    %c0_13 = arith.constant 0 : index
    %28 = vector.load %arg5[%c1_12, %c0_13] : memref<5x128xf32, #tpu.memory_space<vmem>>, vector<1x128xf32>
    %29 = vector.shape_cast %28 : vector<1x128xf32> to vector<1x128xf32>
    %30 = vector.broadcast %29 : vector<1x128xf32> to vector<8x128xf32>
    %31 = arith.select %19, %30, %17 : vector<8x128xi1>, vector<8x128xf32>
    %c2_i32 = arith.constant 2 : i32
    %32 = vector.broadcast %c2_i32 : i32 to vector<8x128xi32>
    %33 = arith.cmpi eq, %0, %32 : vector<8x128xi32>
    %c2 = arith.constant 2 : index
    %c0_14 = arith.constant 0 : index
    %34 = vector.load %arg3[%c2, %c0_14] : memref<5x128xf32, #tpu.memory_space<vmem>>, vector<1x128xf32>
    %35 = vector.shape_cast %34 : vector<1x128xf32> to vector<1x128xf32>
    %36 = vector.broadcast %35 : vector<1x128xf32> to vector<8x128xf32>
    %37 = arith.select %33, %36, %23 : vector<8x128xi1>, vector<8x128xf32>
    %c2_15 = arith.constant 2 : index
    %c0_16 = arith.constant 0 : index
    %38 = vector.load %arg4[%c2_15, %c0_16] : memref<5x128xf32, #tpu.memory_space<vmem>>, vector<1x128xf32>
    %39 = vector.shape_cast %38 : vector<1x128xf32> to vector<1x128xf32>
    %40 = vector.broadcast %39 : vector<1x128xf32> to vector<8x128xf32>
    %41 = arith.select %33, %40, %27 : vector<8x128xi1>, vector<8x128xf32>
    %c2_17 = arith.constant 2 : index
    %c0_18 = arith.constant 0 : index
    %42 = vector.load %arg5[%c2_17, %c0_18] : memref<5x128xf32, #tpu.memory_space<vmem>>, vector<1x128xf32>
    %43 = vector.shape_cast %42 : vector<1x128xf32> to vector<1x128xf32>
    %44 = vector.broadcast %43 : vector<1x128xf32> to vector<8x128xf32>
    %45 = arith.select %33, %44, %31 : vector<8x128xi1>, vector<8x128xf32>
    %c3_i32 = arith.constant 3 : i32
    %46 = vector.broadcast %c3_i32 : i32 to vector<8x128xi32>
    %47 = arith.cmpi eq, %0, %46 : vector<8x128xi32>
    %c3 = arith.constant 3 : index
    %c0_19 = arith.constant 0 : index
    %48 = vector.load %arg3[%c3, %c0_19] : memref<5x128xf32, #tpu.memory_space<vmem>>, vector<1x128xf32>
    %49 = vector.shape_cast %48 : vector<1x128xf32> to vector<1x128xf32>
    %50 = vector.broadcast %49 : vector<1x128xf32> to vector<8x128xf32>
    %51 = arith.select %47, %50, %37 : vector<8x128xi1>, vector<8x128xf32>
    %c3_20 = arith.constant 3 : index
    %c0_21 = arith.constant 0 : index
    %52 = vector.load %arg4[%c3_20, %c0_21] : memref<5x128xf32, #tpu.memory_space<vmem>>, vector<1x128xf32>
    %53 = vector.shape_cast %52 : vector<1x128xf32> to vector<1x128xf32>
    %54 = vector.broadcast %53 : vector<1x128xf32> to vector<8x128xf32>
    %55 = arith.select %47, %54, %41 : vector<8x128xi1>, vector<8x128xf32>
    %c3_22 = arith.constant 3 : index
    %c0_23 = arith.constant 0 : index
    %56 = vector.load %arg5[%c3_22, %c0_23] : memref<5x128xf32, #tpu.memory_space<vmem>>, vector<1x128xf32>
    %57 = vector.shape_cast %56 : vector<1x128xf32> to vector<1x128xf32>
    %58 = vector.broadcast %57 : vector<1x128xf32> to vector<8x128xf32>
    %59 = arith.select %47, %58, %45 : vector<8x128xi1>, vector<8x128xf32>
    %c4_i32 = arith.constant 4 : i32
    %60 = vector.broadcast %c4_i32 : i32 to vector<8x128xi32>
    %61 = arith.cmpi eq, %0, %60 : vector<8x128xi32>
    %c4 = arith.constant 4 : index
    %c0_24 = arith.constant 0 : index
    %62 = vector.load %arg3[%c4, %c0_24] : memref<5x128xf32, #tpu.memory_space<vmem>>, vector<1x128xf32>
    %63 = vector.shape_cast %62 : vector<1x128xf32> to vector<1x128xf32>
    %64 = vector.broadcast %63 : vector<1x128xf32> to vector<8x128xf32>
    %65 = arith.select %61, %64, %51 : vector<8x128xi1>, vector<8x128xf32>
    %c4_25 = arith.constant 4 : index
    %c0_26 = arith.constant 0 : index
    %66 = vector.load %arg4[%c4_25, %c0_26] : memref<5x128xf32, #tpu.memory_space<vmem>>, vector<1x128xf32>
    %67 = vector.shape_cast %66 : vector<1x128xf32> to vector<1x128xf32>
    %68 = vector.broadcast %67 : vector<1x128xf32> to vector<8x128xf32>
    %69 = arith.select %61, %68, %55 : vector<8x128xi1>, vector<8x128xf32>
    %c4_27 = arith.constant 4 : index
    %c0_28 = arith.constant 0 : index
    %70 = vector.load %arg5[%c4_27, %c0_28] : memref<5x128xf32, #tpu.memory_space<vmem>>, vector<1x128xf32>
    %71 = vector.shape_cast %70 : vector<1x128xf32> to vector<1x128xf32>
    %72 = vector.broadcast %71 : vector<1x128xf32> to vector<8x128xf32>
    %73 = arith.select %61, %72, %59 : vector<8x128xi1>, vector<8x128xf32>
    %c0_29 = arith.constant 0 : index
    %c0_30 = arith.constant 0 : index
    %74 = vector.load %arg6[%c0_29, %c0_30] : memref<8x128xf32, #tpu.memory_space<vmem>>, vector<8x128xf32>
    tpu.vector_store %arg6[%c0_29, %c0_30], %65 {strides = array<i32>} : memref<8x128xf32, #tpu.memory_space<vmem>>, vector<8x128xf32>,
    %c0_31 = arith.constant 0 : index
    %c0_32 = arith.constant 0 : index
    %75 = vector.load %arg7[%c0_31, %c0_32] : memref<8x128xf32, #tpu.memory_space<vmem>>, vector<8x128xf32>
    tpu.vector_store %arg7[%c0_31, %c0_32], %69 {strides = array<i32>} : memref<8x128xf32, #tpu.memory_space<vmem>>, vector<8x128xf32>,
    %c0_33 = arith.constant 0 : index
    %c0_34 = arith.constant 0 : index
    %76 = vector.load %arg2[%c0_33, %c0_34] : memref<8x128xf32, #tpu.memory_space<vmem>>, vector<8x128xf32>
    %77 = arith.mulf %76, %73 : vector<8x128xf32>
    %78 = arith.addf %65, %77 : vector<8x128xf32>
    %c0_35 = arith.constant 0 : index
    %c0_36 = arith.constant 0 : index
    %79 = vector.load %arg8[%c0_35, %c0_36] : memref<8x128xf32, #tpu.memory_space<vmem>>, vector<8x128xf32>
    tpu.vector_store %arg8[%c0_35, %c0_36], %78 {strides = array<i32>} : memref<8x128xf32, #tpu.memory_space<vmem>>, vector<8x128xf32>,
    return
  }
  func.func @transform_0(%arg0: i32) -> (i32, i32) {
    %c0_i32 = arith.constant 0 : i32
    %c0_i32_0 = arith.constant 0 : i32
    return %arg0, %c0_i32 : i32, i32
  }
  func.func @transform_1(%arg0: i32) -> (i32, i32) {
    %c0_i32 = arith.constant 0 : i32
    %c0_i32_0 = arith.constant 0 : i32
    return %arg0, %c0_i32 : i32, i32
  }
  func.func @transform_2(%arg0: i32) -> (i32, i32) {
    %c0_i32 = arith.constant 0 : i32
    %c0_i32_0 = arith.constant 0 : i32
    %c0_i32_1 = arith.constant 0 : i32
    return %c0_i32, %c0_i32_0 : i32, i32
  }
  func.func @transform_3(%arg0: i32) -> (i32, i32) {
    %c0_i32 = arith.constant 0 : i32
    %c0_i32_0 = arith.constant 0 : i32
    %c0_i32_1 = arith.constant 0 : i32
    return %c0_i32, %c0_i32_0 : i32, i32
  }
  func.func @transform_4(%arg0: i32) -> (i32, i32) {
    %c0_i32 = arith.constant 0 : i32
    %c0_i32_0 = arith.constant 0 : i32
    %c0_i32_1 = arith.constant 0 : i32
    return %c0_i32, %c0_i32_0 : i32, i32
  }
  func.func @transform_5(%arg0: i32) -> (i32, i32) {
    %c0_i32 = arith.constant 0 : i32
    %c0_i32_0 = arith.constant 0 : i32
    return %arg0, %c0_i32 : i32, i32
  }
  func.func @transform_6(%arg0: i32) -> (i32, i32) {
    %c0_i32 = arith.constant 0 : i32
    %c0_i32_0 = arith.constant 0 : i32
    return %arg0, %c0_i32 : i32, i32
  }
  func.func @transform_7(%arg0: i32) -> (i32, i32) {
    %c0_i32 = arith.constant 0 : i32
    %c0_i32_0 = arith.constant 0 : i32
    return %arg0, %c0_i32 : i32, i32
  }
}

</mosaic_0001>

<llo_original>
// kernel: tpu_custom_call.1
$region0: #{tpu_custom_call.1}
  #allocation0 [shape = 'u32[]', space=smem, size = 0x4, offset = 0x4, fixed_abs, tag = 'smem constant byte address 0x4 - core index']
  #allocation1 [shape = 'u32[144,128]{1,0:T(1,128)}', space=vmem, size = 0x12000, scoped, tag = 'internal scratch']
  %s0 = inlined_call_operand.hbm [shape: s32[8,128], index: 0, kind: input, shape index: {}]
  %s1 = inlined_call_operand.hbm [shape: f32[8,128], index: 1, kind: input, shape index: {}]
  %s2 = inlined_call_operand.hbm [shape: f32[5,128], index: 2, kind: input, shape index: {}]
  %s3 = inlined_call_operand.vmem [shape: f32[5,128], index: 3, kind: input, shape index: {}]
  %s4 = inlined_call_operand.hbm [shape: f32[5,128], index: 4, kind: input, shape index: {}]
  %s5 = inlined_call_operand.hbm [shape: f32[8,128], index: 5, kind: output, shape index: {0}]
  %s6 = inlined_call_operand.hbm [shape: f32[8,128], index: 6, kind: output, shape index: {1}]
  %s7 = inlined_call_operand.hbm [shape: f32[8,128], index: 7, kind: output, shape index: {2}]
  %8 = xla_tuple %s5, %s6, %s7
  %s9 = sld [smem:[#allocation0]]
  $region62: #{tpu_custom_call.1} parent=0
    _
  %s11 = ssub.s32 1, %s9
  %s12 = scalar_select 0, %s11, %s9
  $region1: #{tpu_custom_call.1} parent=0
    #allocation2 [shape = 'u8[4096]{0}', space=vmem, size = 0x1000, scoped, tag = 'input window, operand 0, single buffered']
    #allocation3 [shape = 's32[1]{0}', space=sflag, size = 0x4, scoped, tag = 'scoped memory for tpu_custom_call.1']
    #allocation4 [shape = 's32[1]{0}', space=sflag, size = 0x4, scoped, tag = 'scoped memory for tpu_custom_call.1']
    #allocation5 [shape = 'u8[4096]{0}', space=vmem, size = 0x1000, scoped, tag = 'input window, operand 1, single buffered']
    #allocation6 [shape = 's32[1]{0}', space=sflag, size = 0x4, scoped, tag = 'scoped memory for tpu_custom_call.1']
    #allocation7 [shape = 'u8[4096]{0}', space=vmem, size = 0x1000, scoped, tag = 'input window, operand 2, single buffered']
    #allocation8 [shape = 'u8[4096]{0}', space=vmem, size = 0x1000, scoped, tag = 'input window, operand 4, single buffered']
    #allocation9 [shape = 's32[1]{0}', space=sflag, size = 0x4, scoped, tag = 'scoped memory for tpu_custom_call.1']
    #allocation10 [shape = 'u8[4096]{0}', space=vmem, size = 0x1000, scoped, tag = 'output window, operand 0, single buffered']
    #allocation11 [shape = 'u8[4096]{0}', space=vmem, size = 0x1000, scoped, tag = 'output window, operand 1, single buffered']
    #allocation12 [shape = 's32[1]{0}', space=sflag, size = 0x4, scoped, tag = 'scoped memory for tpu_custom_call.1']
    #allocation13 [shape = 'u8[4096]{0}', space=vmem, size = 0x1000, scoped, tag = 'output window, operand 2, single buffered']
    %13 = vsyncpa [#allocation3], 0
    %14 = vsyncpa [#allocation6], 0
    %15 = vsyncpa [#allocation9], 0
    %16 = vsyncpa [#allocation4], 0
    %17 = vsyncpa [#allocation12], 0
    // Predicated region
    $region2: #{tpu_custom_call.1} parent=1 // pred_check
      _
    $region3: #{tpu_custom_call.1} parent=1 // pred_check_branch
      %19 = sbr.rel (0) target = $region5
    $region4: #{tpu_custom_call.1} parent=1 // pred_region
      %s21 = ssub.s32 128, 128
      %22 = vsyncadd [#allocation3], %s21
      %s24 = sshll.u32 [#allocation2], 4
      %s25 = int_to_ptr.vmem [resolvable:$true] %s24
      %27 = dma.hbm_to_vmem [thread:$0]  %s0, 128, %s25, [#allocation3]
    $region5: #{tpu_custom_call.1} parent=1 // pred_fallthru
      _
    // Predicated region
    $region6: #{tpu_custom_call.1} parent=1 // pred_check
      _
    $region7: #{tpu_custom_call.1} parent=1 // pred_check_branch
      %29 = sbr.rel (0) target = $region9
    $region8: #{tpu_custom_call.1} parent=1 // pred_region
      %s31 = ssub.s32 128, 128
      %32 = vsyncadd [#allocation6], %s31
      %s34 = sshll.u32 [#allocation5], 4
      %s35 = int_to_ptr.vmem [resolvable:$true] %s34
      %37 = dma.hbm_to_vmem [thread:$0]  %s1, 128, %s35, [#allocation6]
    $region9: #{tpu_custom_call.1} parent=1 // pred_fallthru
      _
    // Predicated region
    $region10: #{tpu_custom_call.1} parent=1 // pred_check
      _
    $region11: #{tpu_custom_call.1} parent=1 // pred_check_branch
      %39 = sbr.rel (0) target = $region13
    $region12: #{tpu_custom_call.1} parent=1 // pred_region
      %s41 = ssub.s32 128, 128
      %42 = vsyncadd [#allocation6], %s41
      %s44 = sshll.u32 [#allocation7], 4
      %s45 = int_to_ptr.vmem [resolvable:$true] %s44
      %47 = dma.hbm_to_vmem [thread:$0]  %s2, 128, %s45, [#allocation6]
    $region13: #{tpu_custom_call.1} parent=1 // pred_fallthru
      _
    // Predicated region
    $region14: #{tpu_custom_call.1} parent=1 // pred_check
      _
    $region15: #{tpu_custom_call.1} parent=1 // pred_check_branch
      %49 = sbr.rel (0) target = $region17
    $region16: #{tpu_custom_call.1} parent=1 // pred_region
      _
    $region17: #{tpu_custom_call.1} parent=1 // pred_fallthru
      _
    // Predicated region
    $region18: #{tpu_custom_call.1} parent=1 // pred_check
      _
    $region19: #{tpu_custom_call.1} parent=1 // pred_check_branch
      %51 = sbr.rel (0) target = $region21
    $region20: #{tpu_custom_call.1} parent=1 // pred_region
      %s53 = ssub.s32 128, 128
      %54 = vsyncadd [#allocation9], %s53
      %s56 = sshll.u32 [#allocation8], 4
      %s57 = int_to_ptr.vmem [resolvable:$true] %s56
      %59 = dma.hbm_to_vmem [thread:$0]  %s4, 128, %s57, [#allocation9]
    $region21: #{tpu_custom_call.1} parent=1 // pred_fallthru
      _
    // Predicated region
    $region22: #{tpu_custom_call.1} parent=1 // pred_check
      _
    $region23: #{tpu_custom_call.1} parent=1 // pred_check_branch
      %61 = sbr.rel (0) target = $region25
    $region24: #{tpu_custom_call.1} parent=1 // pred_region
      %62 = dma.done [#allocation3], 128
    $region25: #{tpu_custom_call.1} parent=1 // pred_fallthru
      _
    // Predicated region
    $region26: #{tpu_custom_call.1} parent=1 // pred_check
      _
    $region27: #{tpu_custom_call.1} parent=1 // pred_check_branch
      %64 = sbr.rel (0) target = $region29
    $region28: #{tpu_custom_call.1} parent=1 // pred_region
      %65 = dma.done [#allocation6], 128
    $region29: #{tpu_custom_call.1} parent=1 // pred_fallthru
      _
    // Predicated region
    $region30: #{tpu_custom_call.1} parent=1 // pred_check
      _
    $region31: #{tpu_custom_call.1} parent=1 // pred_check_branch
      %67 = sbr.rel (0) target = $region33
    $region32: #{tpu_custom_call.1} parent=1 // pred_region
      %68 = dma.done [#allocation6], 128
    $region33: #{tpu_custom_call.1} parent=1 // pred_fallthru
      _
    // Predicated region
    $region34: #{tpu_custom_call.1} parent=1 // pred_check
      _
    $region35: #{tpu_custom_call.1} parent=1 // pred_check_branch
      %70 = sbr.rel (0) target = $region37
    $region36: #{tpu_custom_call.1} parent=1 // pred_region
      %71 = dma.done [#allocation9], 128
    $region37: #{tpu_custom_call.1} parent=1 // pred_fallthru
      _
    %v72 = vld [vmem:[#allocation2] sm:$0xff]
    %vm73 = vcmp.eq.s32.totalorder %v72, 0
    %v74 = vld [vmem:[#allocation7] sm:$0x1]
    %v75 = vlaneseq
    %v76 = vshrl.u32 %v75, 7
    %v77 = vsub.s32 0, %v76
    %v78 = vrot.slane %v74, %v77
    %v79 = vsel %vm73, %v78, 0.0
    %v80 = vld [vmem:[%s3] sm:$0x1]
    %v81 = vlaneseq
    %v82 = vshrl.u32 %v81, 7
    %v83 = vsub.s32 0, %v82
    %v84 = vrot.slane %v80, %v83
    %v85 = vsel %vm73, %v84, 0.0
    %v86 = vld [vmem:[#allocation8] sm:$0x1]
    %v87 = vlaneseq
    %v88 = vshrl.u32 %v87, 7
    %v89 = vsub.s32 0, %v88
    %v90 = vrot.slane %v86, %v89
    %v91 = vsel %vm73, %v90, 0.0
    %vm92 = vcmp.eq.s32.totalorder %v72, 1
    %v93 = vld [vmem:[#allocation7 + $0x1] sm:$0x1]
    %v94 = vlaneseq
    %v95 = vshrl.u32 %v94, 7
    %v96 = vsub.s32 0, %v95
    %v97 = vrot.slane %v93, %v96
    %v98 = vsel %vm92, %v97, %v79
    %v99 = vld [vmem:[%s3 + $0x1] sm:$0x1]
    %v100 = vlaneseq
    %v101 = vshrl.u32 %v100, 7
    %v102 = vsub.s32 0, %v101
    %v103 = vrot.slane %v99, %v102
    %v104 = vsel %vm92, %v103, %v85
    %v105 = vld [vmem:[#allocation8 + $0x1] sm:$0x1]
    %v106 = vlaneseq
    %v107 = vshrl.u32 %v106, 7
    %v108 = vsub.s32 0, %v107
    %v109 = vrot.slane %v105, %v108
    %v110 = vsel %vm92, %v109, %v91
    %vm111 = vcmp.eq.s32.totalorder %v72, 2
    %v112 = vld [vmem:[#allocation7 + $0x2] sm:$0x1]
    %v113 = vlaneseq
    %v114 = vshrl.u32 %v113, 7
    %v115 = vsub.s32 0, %v114
    %v116 = vrot.slane %v112, %v115
    %v117 = vsel %vm111, %v116, %v98
    %v118 = vld [vmem:[%s3 + $0x2] sm:$0x1]
    %v119 = vlaneseq
    %v120 = vshrl.u32 %v119, 7
    %v121 = vsub.s32 0, %v120
    %v122 = vrot.slane %v118, %v121
    %v123 = vsel %vm111, %v122, %v104
    %v124 = vld [vmem:[#allocation8 + $0x2] sm:$0x1]
    %v125 = vlaneseq
    %v126 = vshrl.u32 %v125, 7
    %v127 = vsub.s32 0, %v126
    %v128 = vrot.slane %v124, %v127
    %v129 = vsel %vm111, %v128, %v110
    %vm130 = vcmp.eq.s32.totalorder %v72, 3
    %v131 = vld [vmem:[#allocation7 + $0x3] sm:$0x1]
    %v132 = vlaneseq
    %v133 = vshrl.u32 %v132, 7
    %v134 = vsub.s32 0, %v133
    %v135 = vrot.slane %v131, %v134
    %v136 = vsel %vm130, %v135, %v117
    %v137 = vld [vmem:[%s3 + $0x3] sm:$0x1]
    %v138 = vlaneseq
    %v139 = vshrl.u32 %v138, 7
    %v140 = vsub.s32 0, %v139
    %v141 = vrot.slane %v137, %v140
    %v142 = vsel %vm130, %v141, %v123
    %v143 = vld [vmem:[#allocation8 + $0x3] sm:$0x1]
    %v144 = vlaneseq
    %v145 = vshrl.u32 %v144, 7
    %v146 = vsub.s32 0, %v145
    %v147 = vrot.slane %v143, %v146
    %v148 = vsel %vm130, %v147, %v129
    %vm149 = vcmp.eq.s32.totalorder %v72, 4
    %v150 = vld [vmem:[#allocation7 + $0x4] sm:$0x1]
    %v151 = vlaneseq
    %v152 = vshrl.u32 %v151, 7
    %v153 = vsub.s32 0, %v152
    %v154 = vrot.slane %v150, %v153
    %v155 = vsel %vm149, %v154, %v136
    %v156 = vld [vmem:[%s3 + $0x4] sm:$0x1]
    %v157 = vlaneseq
    %v158 = vshrl.u32 %v157, 7
    %v159 = vsub.s32 0, %v158
    %v160 = vrot.slane %v156, %v159
    %v161 = vsel %vm149, %v160, %v142
    %v162 = vld [vmem:[#allocation8 + $0x4] sm:$0x1]
    %v163 = vlaneseq
    %v164 = vshrl.u32 %v163, 7
    %v165 = vsub.s32 0, %v164
    %v166 = vrot.slane %v162, %v165
    %v167 = vsel %vm149, %v166, %v148
    %168 = vst [vmem:[#allocation10] sm:$0xff] %v155
    %169 = vst [vmem:[#allocation11] sm:$0xff] %v161
    %v170 = vld [vmem:[#allocation5] sm:$0xff]
    %v171 = vmul.f32 %v170, %v167
    %v172 = vadd.f32 %v155, %v171
    %173 = vst [vmem:[#allocation13] sm:$0xff] %v172
    // Predicated region
    $region38: #{tpu_custom_call.1} parent=1 // pred_check
      _
    $region39: #{tpu_custom_call.1} parent=1 // pred_check_branch
      %175 = sbr.rel (0) target = $region41
    $region40: #{tpu_custom_call.1} parent=1 // pred_region
      %s177 = ssub.s32 128, 128
      %178 = vsyncadd [#allocation4], %s177
      %s180 = sshll.u32 [#allocation10], 4
      %s181 = int_to_ptr.vmem [resolvable:$true] %s180
      %183 = dma.vmem_to_hbm [thread:$0]  %s181, 128, %s5, [#allocation4]
    $region41: #{tpu_custom_call.1} parent=1 // pred_fallthru
      _
    // Predicated region
    $region42: #{tpu_custom_call.1} parent=1 // pred_check
      _
    $region43: #{tpu_custom_call.1} parent=1 // pred_check_branch
      %185 = sbr.rel (0) target = $region45
    $region44: #{tpu_custom_call.1} parent=1 // pred_region
      %s187 = ssub.s32 128, 128
      %188 = vsyncadd [#allocation12], %s187
      %s190 = sshll.u32 [#allocation11], 4
      %s191 = int_to_ptr.vmem [resolvable:$true] %s190
      %193 = dma.vmem_to_hbm [thread:$0]  %s191, 128, %s6, [#allocation12]
    $region45: #{tpu_custom_call.1} parent=1 // pred_fallthru
      _
    // Predicated region
    $region46: #{tpu_custom_call.1} parent=1 // pred_check
      _
    $region47: #{tpu_custom_call.1} parent=1 // pred_check_branch
      %195 = sbr.rel (0) target = $region49
    $region48: #{tpu_custom_call.1} parent=1 // pred_region
      %s197 = ssub.s32 128, 128
      %198 = vsyncadd [#allocation12], %s197
      %s200 = sshll.u32 [#allocation13], 4
      %s201 = int_to_ptr.vmem [resolvable:$true] %s200
      %203 = dma.vmem_to_hbm [thread:$0]  %s201, 128, %s7, [#allocation12]
    $region49: #{tpu_custom_call.1} parent=1 // pred_fallthru
      _
    // Predicated region
    $region50: #{tpu_custom_call.1} parent=1 // pred_check
      _
    $region51: #{tpu_custom_call.1} parent=1 // pred_check_branch
      %205 = sbr.rel (0) target = $region53
    $region52: #{tpu_custom_call.1} parent=1 // pred_region
      %206 = dma.done [#allocation4], 128
    $region53: #{tpu_custom_call.1} parent=1 // pred_fallthru
      _
    // Predicated region
    $region54: #{tpu_custom_call.1} parent=1 // pred_check
      _
    $region55: #{tpu_custom_call.1} parent=1 // pred_check_branch
      %208 = sbr.rel (0) target = $region57
    $region56: #{tpu_custom_call.1} parent=1 // pred_region
      %209 = dma.done [#allocation12], 128
    $region57: #{tpu_custom_call.1} parent=1 // pred_fallthru
      _
    // Predicated region
    $region58: #{tpu_custom_call.1} parent=1 // pred_check
      _
    $region59: #{tpu_custom_call.1} parent=1 // pred_check_branch
      %211 = sbr.rel (0) target = $region61
    $region60: #{tpu_custom_call.1} parent=1 // pred_region
      %212 = dma.done [#allocation12], 128
    $region61: #{tpu_custom_call.1} parent=1 // pred_fallthru
      _
    %213 = vsyncpa [#allocation3], 1
    %214 = vsyncpa [#allocation6], 1
    %215 = vsyncpa [#allocation9], 1
    %216 = vsyncpa [#allocation4], 1
    %217 = vsyncpa [#allocation12], 1

</llo_original>
